<compile_context>
chip_gen: v7x
topology: tpu7x:2x2x1
jax: 0.10.0
libtpu: 0.0.40
codegen_flags: <defaults>
</compile_context>

<pallas_src>
import jax
import jax.numpy as jnp
from jax.experimental import pallas as pl
from jax.experimental.pallas import tpu as pltpu

_LANE = 128
_MAX_BLOCK_LANES = 128 * 1024   # lanes per grid step (>= ~1 MiB real data for T>=2)
_NUM_CORES = 2                  # v7x has 2 TCs/chip; extra axis is harmless elsewhere


def _round_up(x, m):
    return ((x + m - 1) // m) * m


def _sumsq_kernel(lbl_ref, pred_ref, out_ref):
    # lbl_ref / pred_ref: [T, bt] lane-dense tiles (batch on lanes).
    # out_ref: [T, 1] per-core running sum of squared errors (grid-resident).
    i = pl.program_id(1)

    @pl.when(i == 0)
    def _init():
        out_ref[...] = jnp.zeros_like(out_ref)

    d = pred_ref[...].astype(jnp.float32) - lbl_ref[...].astype(jnp.float32)
    out_ref[...] += jnp.sum(d * d, axis=-1, keepdims=True)   # [T, 1]


def multitask_sumsq_pallas(lbl_slab, pred_slab, block_lanes=_MAX_BLOCK_LANES):
    """lbl_slab / pred_slab: [T, B] (any float dtype, batch on the lane axis).

    Returns a [T] f32 vector of per-task sums of squared errors over all B."""
    T, B = lbl_slab.shape
    assert pred_slab.shape == (T, B)

    bt = min(_round_up(B, _LANE), block_lanes)        # lane-tile, multiple of 128
    nb = pl.cdiv(pl.cdiv(B, bt), _NUM_CORES)          # blocks per core
    Bp = _NUM_CORES * nb * bt
    if Bp != B:
        # Zero padding: (0 - 0)^2 contributes nothing to the sums.
        lbl_slab = jnp.pad(lbl_slab, ((0, 0), (0, Bp - B)))
        pred_slab = jnp.pad(pred_slab, ((0, 0), (0, Bp - B)))

    part = pl.pallas_call(
        _sumsq_kernel,
        out_shape=jax.ShapeDtypeStruct((_NUM_CORES, T, 1), jnp.float32),
        grid_spec=pltpu.PrefetchScalarGridSpec(
            num_scalar_prefetch=0,
            grid=(_NUM_CORES, nb),
            in_specs=[
                pl.BlockSpec((T, bt), lambda c, i: (0, c * nb + i)),
                pl.BlockSpec((T, bt), lambda c, i: (0, c * nb + i)),
            ],
            out_specs=pl.BlockSpec((None, T, 1), lambda c, i: (c, 0, 0)),
        ),
        compiler_params=pltpu.CompilerParams(
            dimension_semantics=("parallel", "arbitrary"),
            vmem_limit_bytes=32 * 1024 * 1024,   # safe on v5e/v6e/v7x
        ),
    )(lbl_slab, pred_slab)

    return jnp.sum(part, axis=(0, 2))   # add the per-core partial sums -> [T]


class MultiTaskLossPallas:
    """JAX/Pallas re-implementation of the PyTorch MultiTaskLoss module."""

    def __init__(self, training_params):
        self.regression_names = training_params['regression_names']
        self.main_task = training_params['main_task'][0]
        self.loss_weights = {}
        for name in self.regression_names:
            if self.main_task in name:
                self.loss_weights[name] = training_params['loss_weights']['main_task']
            else:
                n_aux = len(self.regression_names) - 1
                self.loss_weights[name] = (
                    0.0 if n_aux == 0
                    else training_params['loss_weights']['auxillary_task'] / n_aux)

    def __call__(self, out, label):
        names = list(out.keys())
        B = label.shape[0]
        cols = [self.regression_names.index(n) for n in names]   # static ints

        # Lane-dense slabs: tasks on sublanes, batch on lanes.  Layout plumbing
        # only (stack / static column slice); the reduction runs in the kernel.
        pred_slab = jnp.stack([out[n].reshape(B) for n in names], axis=0)   # [T, B]
        lbl_slab = jnp.stack([label[:, c] for c in cols], axis=0)           # [T, B]

        sums = multitask_sumsq_pallas(lbl_slab, pred_slab)                  # [T] f32
        mse = sums / jnp.float32(B)

        losses = {n: mse[t] for t, n in enumerate(names)}
        weights = jnp.asarray([float(self.loss_weights[n]) for n in names],
                              dtype=jnp.float32)
        losses['total'] = jnp.dot(mse, weights)
        return losses


if __name__ == "__main__":
    regression_names = ['VO2rel', 'HR', 'RR']
    training_params = {
        'regression_names': regression_names,
        'device': None,
        'main_task': ['VO2'],
        'loss_weights': {'main_task': 1.0, 'auxillary_task': 0.5},
    }

    B = 16
    T = len(regression_names)

    key = jax.random.PRNGKey(0)
    k_out, k_lbl = jax.random.split(key)
    out_vals = jax.random.normal(k_out, (T, B, 1), dtype=jnp.float32)

    # Model heads typically emit bf16 [B, 1]; dict order deliberately differs
    # from regression_names to exercise the column mapping.
    task_order = ['HR', 'VO2rel', 'RR']
    out = {name: out_vals[i].astype(jnp.bfloat16)
           for i, name in enumerate(task_order)}
    label = jax.random.normal(k_lbl, (B, T), dtype=jnp.float32)

    loss_mod = MultiTaskLossPallas(training_params)
    losses = loss_mod(out, label)
    losses = jax.tree_util.tree_map(jax.block_until_ready, losses)

    # Pure-JAX reference check.
    ref = {}
    for name in out.keys():
        col = regression_names.index(name)
        diff = out[name][:, 0].astype(jnp.float32) - label[:, col]
        ref[name] = jnp.mean(diff * diff)
    ref_total = sum(loss_mod.loss_weights[n] * ref[n] for n in out.keys())

    ok = True
    for name in out.keys():
        ok &= bool(jnp.allclose(losses[name], ref[name], atol=1e-5, rtol=1e-5))
    ok &= bool(jnp.allclose(losses['total'], ref_total, atol=1e-5, rtol=1e-5))

    if ok:
        print("KERNEL_OK")
    else:
        print("MISMATCH", losses, ref, ref_total)
</pallas_src>

<mosaic_0001>
module attributes {stable_mosaic.version = 11 : i64} {
  func.func @_sumsq_kernel(%arg0: i32, %arg1: i32, %arg2: memref<3x128xf32, #tpu.memory_space<vmem>>, %arg3: memref<3x128xbf16, #tpu.memory_space<vmem>>, %arg4: memref<1x3x1xf32, #tpu.memory_space<vmem>>) attributes {dimension_semantics = [#tpu.dimension_semantics<parallel>, #tpu.dimension_semantics<arbitrary>], iteration_bounds = array<i64: 2, 1>, scalar_prefetch = 0 : i64, scratch_operands = 0 : i64, tpu.core_type = #tpu.core_type<tc>, window_params = [{transform_indices = @transform_0, window_bounds = array<i64: 3, 128>}, {transform_indices = @transform_1, window_bounds = array<i64: 3, 128>}, {transform_indices = @transform_2, window_bounds = array<i64: 1, 3, 1>}]} {
    %c0_i32 = arith.constant 0 : i32
    %0 = arith.cmpi eq, %arg1, %c0_i32 : i32
    %1 = arith.extui %0 : i1 to i32
    %c0_i32_0 = arith.constant 0 : i32
    %2 = arith.cmpi ne, %1, %c0_i32_0 : i32
    scf.if %2 {
      %cst_10 = arith.constant 0.000000e+00 : f32
      %16 = vector.broadcast %cst_10 : f32 to vector<3x1xf32>
      %c0_11 = arith.constant 0 : index
      %c0_12 = arith.constant 0 : index
      %c0_13 = arith.constant 0 : index
      %17 = vector.load %arg4[%c0_11, %c0_12, %c0_13] : memref<1x3x1xf32, #tpu.memory_space<vmem>>, vector<1x3x1xf32>
      %18 = vector.shape_cast %17 : vector<1x3x1xf32> to vector<3x1xf32>
      %19 = vector.shape_cast %16 : vector<3x1xf32> to vector<1x3x1xf32>
      tpu.vector_store %arg4[%c0_11, %c0_12, %c0_13], %19 {strides = array<i32>} : memref<1x3x1xf32, #tpu.memory_space<vmem>>, vector<1x3x1xf32>,
    } else {
    }
    %c0 = arith.constant 0 : index
    %c0_1 = arith.constant 0 : index
    %3 = vector.load %arg3[%c0, %c0_1] : memref<3x128xbf16, #tpu.memory_space<vmem>>, vector<3x128xbf16>
    %4 = arith.extf %3 : vector<3x128xbf16> to vector<3x128xf32>
    %c0_2 = arith.constant 0 : index
    %c0_3 = arith.constant 0 : index
    %5 = vector.load %arg2[%c0_2, %c0_3] : memref<3x128xf32, #tpu.memory_space<vmem>>, vector<3x128xf32>
    %6 = arith.subf %4, %5 : vector<3x128xf32>
    %c0_4 = arith.constant 0 : index
    %c0_5 = arith.constant 0 : index
    %c0_6 = arith.constant 0 : index
    %7 = vector.load %arg4[%c0_4, %c0_5, %c0_6] : memref<1x3x1xf32, #tpu.memory_space<vmem>>, vector<1x3x1xf32>
    %8 = vector.shape_cast %7 : vector<1x3x1xf32> to vector<3x1xf32>
    %9 = arith.mulf %6, %6 : vector<3x128xf32>
    %cst = arith.constant dense<0.000000e+00> : vector<3xf32>
    %10 = vector.multi_reduction <add>, %9, %cst [1] : vector<3x128xf32> to vector<3xf32>
    %11 = vector.shape_cast %10 : vector<3xf32> to vector<3x1xf32>
    %12 = arith.addf %8, %11 : vector<3x1xf32>
    %c0_7 = arith.constant 0 : index
    %c0_8 = arith.constant 0 : index
    %c0_9 = arith.constant 0 : index
    %13 = vector.load %arg4[%c0_7, %c0_8, %c0_9] : memref<1x3x1xf32, #tpu.memory_space<vmem>>, vector<1x3x1xf32>
    %14 = vector.shape_cast %13 : vector<1x3x1xf32> to vector<3x1xf32>
    %15 = vector.shape_cast %12 : vector<3x1xf32> to vector<1x3x1xf32>
    tpu.vector_store %arg4[%c0_7, %c0_8, %c0_9], %15 {strides = array<i32>} : memref<1x3x1xf32, #tpu.memory_space<vmem>>, vector<1x3x1xf32>,
    return
  }
  func.func @transform_0(%arg0: i32, %arg1: i32) -> (i32, i32) {
    %c1_i32 = arith.constant 1 : i32
    %0 = arith.muli %arg0, %c1_i32 : i32
    %1 = arith.addi %0, %arg1 : i32
    %c0_i32 = arith.constant 0 : i32
    %c0_i32_0 = arith.constant 0 : i32
    return %c0_i32, %1 : i32, i32
  }
  func.func @transform_1(%arg0: i32, %arg1: i32) -> (i32, i32) {
    %c1_i32 = arith.constant 1 : i32
    %0 = arith.muli %arg0, %c1_i32 : i32
    %1 = arith.addi %0, %arg1 : i32
    %c0_i32 = arith.constant 0 : i32
    %c0_i32_0 = arith.constant 0 : i32
    return %c0_i32, %1 : i32, i32
  }
  func.func @transform_2(%arg0: i32, %arg1: i32) -> (i32, i32, i32) {
    %c0_i32 = arith.constant 0 : i32
    %c0_i32_0 = arith.constant 0 : i32
    %c0_i32_1 = arith.constant 0 : i32
    return %arg0, %c0_i32, %c0_i32_0 : i32, i32, i32
  }
}

</mosaic_0001>

<llo_original>
// kernel: tpu_custom_call.1
$region0: #{tpu_custom_call.1}
  #allocation0 [shape = 'u32[]', space=smem, size = 0x4, offset = 0x4, fixed_abs, tag = 'smem constant byte address 0x4 - core index']
  #allocation1 [shape = 'u32[144,128]{1,0:T(1,128)}', space=vmem, size = 0x12000, scoped, tag = 'internal scratch']
  %s0 = inlined_call_operand.hbm [shape: f32[3,256], index: 0, kind: input, shape index: {}]
  %s1 = inlined_call_operand.hbm [shape: bf16[3,256], index: 1, kind: input, shape index: {}]
  %s2 = inlined_call_operand.vmem [shape: f32[2,3,1], index: 2, kind: output, shape index: {}]
  %s3 = sld [smem:[#allocation0]]
  $region53: #{tpu_custom_call.1} parent=0
    _
  %s5 = ssub.s32 1, %s3
  %s6 = scalar_select 0, %s5, %s3
  $region1: #{tpu_custom_call.1} parent=0
    #allocation2 [shape = 'u8[4096]{0}', space=vmem, size = 0x1000, scoped, tag = 'input window, operand 0']
    #allocation3 [shape = 's32[2]{0}', space=sflag, size = 0x8, scoped, tag = 'scoped memory for tpu_custom_call.1']
    #allocation4 [shape = 'u8[2048]{0}', space=vmem, size = 0x800, scoped, tag = 'input window, operand 1']
    #allocation5 [shape = 's32[2]{0}', space=sflag, size = 0x8, scoped, tag = 'scoped memory for tpu_custom_call.1']
    %7 = vsyncpa [#allocation3], 0
    %s8 = scalar_lea.sflag [#allocation3], 1
    %9 = vsyncpa %s8, 0
    %10 = vsyncpa [#allocation5], 0
    %s11 = scalar_lea.sflag [#allocation5], 1
    %12 = vsyncpa %s11, 0
    loop: start=0, step=1, limit=4
    $region2: #{tpu_custom_call.1} parent=1 // loop_pre_header
      _
    $region3: #{tpu_custom_call.1} parent=1 // loop_header
      %s14 = sphi 0, %s18
      %p15 = scmp.ge.s32.totalorder %s14, 4
      %s21 = sphi 0, %s33
      %s22 = sphi 0, %s29
      %s23 = sphi 0, %s21
      %s24 = sphi 0, %s22
      %s25 = sphi 0, %s23
      %s26 = sphi 0, %s24
      %s38 = sphi 0, %s40
      %s41 = sphi 0, %s38
      %s42 = sphi 0, %s41
      %s58 = sphi 0, %s42
      %s66 = sphi 0, %s68
      %s69 = sphi 0, %s66
      %s70 = sphi 0, %s69
      %s86 = sphi 0, %s70
      %s92 = sphi 0, %s94
      %s95 = sphi 0, %s92
      %s96 = sphi 0, %s95
      %s112 = sphi 0, %s96
    $region4: #{tpu_custom_call.1} parent=1 // loop_header_branch
      %17 = sbr.rel (%p15) target = $region8
    $region5: #{tpu_custom_call.1} parent=1 // loop_body
      %s19 = ssub.s32 %s14, 1
      %s20 = ssub.s32 %s14, 2
      %s27 = sadd.s32 1, %s22
      %p28 = scmp.ge.s32.totalorder %s27, 1
      %s29 = scalar_select %p28, 0, %s27
      %s30 = sadd.s32 1, %s21
      %s31 = scalar_select %p28, %s30, %s21
      %p32 = scmp.ge.s32.totalorder %s31, 2
      %s33 = scalar_select %p32, 0, %s31
      %s34 = sadd.s32 %s21, %s22
      %s35 = sadd.s32 %s33, %s29
      %s36 = ssub.s32 %s34, %s35
      %p37 = scmp.eq.s32.totalorder %s36, 0
      %s39 = sadd.s32 %s38, 1
      %s40 = scalar_select %p37, %s38, %s39
      %p43 = pneg %p37
      %p44 = scmp.eq.s32.totalorder %s14, 1
      %p45 = por %p43, %p44
      %p46 = scmp.ne.s32.totalorder %s38, %s41
      %p47 = scmp.eq.s32.totalorder %s14, 0
      %p48 = por %p46, %p47
      %p49 = scmp.ne.s32.totalorder %s38, %s41
      %p50 = scmp.eq.s32.totalorder %s19, 1
      %p51 = por %p49, %p50
      %p52 = scmp.ne.s32.totalorder %s41, %s42
      %p53 = scmp.eq.s32.totalorder %s19, 0
      %p54 = por %p52, %p53
      %p55 = scmp.ne.s32.totalorder %s41, %s42
      %p56 = scmp.eq.s32.totalorder %s20, 1
      %p57 = por %p55, %p56
      %p59 = scmp.ne.s32.totalorder %s42, %s58
      %p60 = scmp.eq.s32.totalorder %s20, 0
      %p61 = por %p59, %p60
      %s62 = sadd.s32 %s21, %s22
      %s63 = sadd.s32 %s33, %s29
      %s64 = ssub.s32 %s62, %s63
      %p65 = scmp.eq.s32.totalorder %s64, 0
      %s67 = sadd.s32 %s66, 1
      %s68 = scalar_select %p65, %s66, %s67
      %p71 = pneg %p65
      %p72 = scmp.eq.s32.totalorder %s14, 1
      %p73 = por %p71, %p72
      %p74 = scmp.ne.s32.totalorder %s66, %s69
      %p75 = scmp.eq.s32.totalorder %s14, 0
      %p76 = por %p74, %p75
      %p77 = scmp.ne.s32.totalorder %s66, %s69
      %p78 = scmp.eq.s32.totalorder %s19, 1
      %p79 = por %p77, %p78
      %p80 = scmp.ne.s32.totalorder %s69, %s70
      %p81 = scmp.eq.s32.totalorder %s19, 0
      %p82 = por %p80, %p81
      %p83 = scmp.ne.s32.totalorder %s69, %s70
      %p84 = scmp.eq.s32.totalorder %s20, 1
      %p85 = por %p83, %p84
      %p87 = scmp.ne.s32.totalorder %s70, %s86
      %p88 = scmp.eq.s32.totalorder %s20, 0
      %p89 = por %p87, %p88
      %s90 = ssub.s32 %s21, %s33
      %p91 = scmp.eq.s32.totalorder %s90, 0
      %s93 = sadd.s32 %s92, 1
      %s94 = scalar_select %p91, %s92, %s93
      %p97 = pneg %p91
      %p98 = scmp.eq.s32.totalorder %s14, 1
      %p99 = por %p97, %p98
      %p100 = scmp.ne.s32.totalorder %s92, %s95
      %p101 = scmp.eq.s32.totalorder %s14, 0
      %p102 = por %p100, %p101
      %p103 = scmp.ne.s32.totalorder %s92, %s95
      %p104 = scmp.eq.s32.totalorder %s19, 1
      %p105 = por %p103, %p104
      %p106 = scmp.ne.s32.totalorder %s95, %s96
      %p107 = scmp.eq.s32.totalorder %s19, 0
      %p108 = por %p106, %p107
      %p109 = scmp.ne.s32.totalorder %s95, %s96
      %p110 = scmp.eq.s32.totalorder %s20, 1
      %p111 = por %p109, %p110
      %p113 = scmp.ne.s32.totalorder %s96, %s112
      %p114 = scmp.eq.s32.totalorder %s20, 0
      %p115 = por %p113, %p114
      %p116 = scmp.le.s32.totalorder 1, %s14
      %p117 = scmp.lt.s32.totalorder %s14, 3
      %p118 = pnand %p116, %p117
      %p119 = pneg %p118
      // Predicated region
      $region9: #{tpu_custom_call.1} parent=5 // pred_check
        _
      $region10: #{tpu_custom_call.1} parent=5 // pred_check_branch
        %121 = sbr.rel (%p118) target = $region12
      $region11: #{tpu_custom_call.1} parent=5 // pred_region
        %s122 = ssub.s32 %s14, 1
      $region12: #{tpu_custom_call.1} parent=5 // pred_fallthru
        _
      %p123 = scmp.lt.s32.totalorder %s14, 2
      // Predicated region
      $region13: #{tpu_custom_call.1} parent=5 // pred_check
        %p124 = pneg %p123
      $region14: #{tpu_custom_call.1} parent=5 // pred_check_branch
        %126 = sbr.rel (%p124) target = $region16
      $region15: #{tpu_custom_call.1} parent=5 // pred_region
        // Predicated region
        $region17: #{tpu_custom_call.1} parent=15 // pred_check
          %p127 = pneg %p48
        $region18: #{tpu_custom_call.1} parent=15 // pred_check_branch
          %129 = sbr.rel (%p127) target = $region20
        $region19: #{tpu_custom_call.1} parent=15 // pred_region
          %s130 = sand.u32 %s38, 1
          %s131 = scalar_lea.sflag [#allocation3], %s130
          %s132 = sand.u32 %s38, 1
          %s133 = smul.addr %s132, 4
          %s134 = scalar_lea.vmem [#allocation2], %s133
          %s135 = sadd.s32 %s21, %s22
          %s137 = ssub.s32 64, 64
          %138 = vsyncadd %s131, %s137
          %s139 = smul.addr %s135, 64
          %s140 = scalar_lea.hbm %s0, %s139
          %s142 = sshll.u32 %s134, 4
          %s143 = int_to_ptr.vmem [resolvable:$true] %s142
          %145 = dma.hbm_to_vmem [thread:$0]  %s140, 64, %s143, %s131
        $region20: #{tpu_custom_call.1} parent=15 // pred_fallthru
          _
        // Predicated region
        $region21: #{tpu_custom_call.1} parent=15 // pred_check
          %p146 = pneg %p76
        $region22: #{tpu_custom_call.1} parent=15 // pred_check_branch
          %148 = sbr.rel (%p146) target = $region24
        $region23: #{tpu_custom_call.1} parent=15 // pred_region
          %s149 = sand.u32 %s66, 1
          %s150 = scalar_lea.sflag [#allocation5], %s149
          %s151 = sand.u32 %s66, 1
          %s152 = smul.addr %s151, 2
          %s153 = scalar_lea.vmem [#allocation4], %s152
          %s154 = sadd.s32 %s21, %s22
          %s156 = ssub.s32 32, 32
          %157 = vsyncadd %s150, %s156
          %s158 = smul.addr %s154, 32
          %s159 = scalar_lea.hbm %s1, %s158
          %s161 = sshll.u32 %s153, 4
          %s162 = int_to_ptr.vmem [resolvable:$true] %s161
          %164 = dma.hbm_to_vmem [thread:$0]  %s159, 32, %s162, %s150
        $region24: #{tpu_custom_call.1} parent=15 // pred_fallthru
          _
      $region16: #{tpu_custom_call.1} parent=5 // pred_fallthru
        _
      %p165 = scmp.le.s32.totalorder 1, %s14
      %p166 = scmp.lt.s32.totalorder %s14, 3
      %p167 = pnand %p165, %p166
      %p168 = pneg %p167
      // Predicated region
      $region25: #{tpu_custom_call.1} parent=5 // pred_check
        _
      $region26: #{tpu_custom_call.1} parent=5 // pred_check_branch
        %170 = sbr.rel (%p167) target = $region28
      $region27: #{tpu_custom_call.1} parent=5 // pred_region
        %s171 = ssub.s32 %s14, 1
        %s172 = sand.u32 %s41, 1
        %s173 = scalar_lea.sflag [#allocation3], %s172
        %s174 = sand.u32 %s41, 1
        %s175 = smul.addr %s174, 4
        %s176 = scalar_lea.vmem [#allocation2], %s175
        // Predicated region
        $region29: #{tpu_custom_call.1} parent=27 // pred_check
          %p177 = pneg %p54
        $region30: #{tpu_custom_call.1} parent=27 // pred_check_branch
          %179 = sbr.rel (%p177) target = $region32
        $region31: #{tpu_custom_call.1} parent=27 // pred_region
          %180 = dma.done %s173, 64
        $region32: #{tpu_custom_call.1} parent=27 // pred_fallthru
          _
        %s181 = sand.u32 %s69, 1
        %s182 = scalar_lea.sflag [#allocation5], %s181
        %s183 = sand.u32 %s69, 1
        %s184 = smul.addr %s183, 2
        %s185 = scalar_lea.vmem [#allocation4], %s184
        // Predicated region
        $region33: #{tpu_custom_call.1} parent=27 // pred_check
          %p186 = pneg %p82
        $region34: #{tpu_custom_call.1} parent=27 // pred_check_branch
          %188 = sbr.rel (%p186) target = $region36
        $region35: #{tpu_custom_call.1} parent=27 // pred_region
          %189 = dma.done %s182, 32
        $region36: #{tpu_custom_call.1} parent=27 // pred_fallthru
          _
        %s190 = sand.u32 %s41, 1
        %s191 = scalar_lea.sflag [#allocation3], %s190
        %s192 = sand.u32 %s41, 1
        %s193 = smul.addr %s192, 4
        %s194 = scalar_lea.vmem [#allocation2], %s193
        %p195 = pneg %p54
        %p196 = pneg %p51
        %s197 = sand.u32 %s69, 1
        %s198 = scalar_lea.sflag [#allocation5], %s197
        %s199 = sand.u32 %s69, 1
        %s200 = smul.addr %s199, 2
        %s201 = scalar_lea.vmem [#allocation4], %s200
        %p202 = pneg %p82
        %p203 = pneg %p79
        %p204 = pneg %p108
        %p205 = pneg %p105
        %p206 = scmp.lt.s32.totalorder %s23, 1
        %s207 = scalar_select %p206, %s23, 1
        %s208 = smul.addr %s207, 4
        %s209 = scalar_lea.vmem %s2, %s208
        %s210 = sadd.s32 %s23, %s24
        %s211 = sadd.s32 %s23, %s24
        %p212 = scmp.lt.s32.totalorder %s23, 1
        %s213 = scalar_select %p212, %s23, 1
        %s214 = smul.addr %s213, 4
        %s215 = scalar_lea.vmem %s2, %s214
        %p216 = scmp.eq.s32.totalorder %s24, 0
        // Predicated region
        $region37: #{tpu_custom_call.1} parent=27 // pred_check
          %p217 = pneg %p216
        $region38: #{tpu_custom_call.1} parent=27 // pred_check_branch
          %219 = sbr.rel (%p217) target = $region40
        $region39: #{tpu_custom_call.1} parent=27 // pred_region
          %vm220 = vcmask 2048
          %221 = vst.msk [vmem:[%s215] sm:$0x7] %vm220, 0.0
        $region40: #{tpu_custom_call.1} parent=27 // pred_fallthru
          _
        %v222 = vld [vmem:[%s185] sm:$0x3]
        %v223 = vunpack.c.l.bf16 %v222
        %v224 = vld [vmem:[%s176] sm:$0x7]
        %v225 = vsub.f32 %v223, %v224
        %v226 = vld [vmem:[%s215] sm:$0x7]
        %v227 = vmul.f32 %v225, %v225
        %vm228 = vcmask 1042432
        %v229 = vsel %vm228, %v227, 0.0
        %230 = vadd.xlane.f32.xlu0 %v229
        %v231 = vpop.xlane.xlu0 %230
        %v232 = vadd.f32 %v226, %v231
        %vm233 = vcmask 2048
        %234 = vst.msk [vmem:[%s215] sm:$0x7] %vm233, %v232
        %p235 = scmp.lt.s32.totalorder %s23, 1
        %s236 = scalar_select %p235, %s23, 1
        %s237 = smul.addr %s236, 4
        %s238 = scalar_lea.vmem %s2, %s237
        // Predicated region
        $region41: #{tpu_custom_call.1} parent=27 // pred_check
          %p239 = pneg %p105
        $region42: #{tpu_custom_call.1} parent=27 // pred_check_branch
          %241 = sbr.rel (%p239) target = $region44
        $region43: #{tpu_custom_call.1} parent=27 // pred_region
          _
        $region44: #{tpu_custom_call.1} parent=27 // pred_fallthru
          _
      $region28: #{tpu_custom_call.1} parent=5 // pred_fallthru
        _
      %p242 = scmp.le.s32.totalorder 2, %s14
      // Predicated region
      $region45: #{tpu_custom_call.1} parent=5 // pred_check
        %p243 = pneg %p242
      $region46: #{tpu_custom_call.1} parent=5 // pred_check_branch
        %245 = sbr.rel (%p243) target = $region48
      $region47: #{tpu_custom_call.1} parent=5 // pred_region
        %s246 = ssub.s32 %s14, 2
        // Predicated region
        $region49: #{tpu_custom_call.1} parent=47 // pred_check
          %p247 = pneg %p111
        $region50: #{tpu_custom_call.1} parent=47 // pred_check_branch
          %249 = sbr.rel (%p247) target = $region52
        $region51: #{tpu_custom_call.1} parent=47 // pred_region
          %p250 = scmp.lt.s32.totalorder %s25, 1
          %s251 = scalar_select %p250, %s25, 1
          %s252 = smul.addr %s251, 4
          %s253 = scalar_lea.vmem %s2, %s252
        $region52: #{tpu_custom_call.1} parent=47 // pred_fallthru
          _
      $region48: #{tpu_custom_call.1} parent=5 // pred_fallthru
        _
    $region6: #{tpu_custom_call.1} parent=1 // loop_footer
      %s18 = sadd.s32 1, %s14
    $region7: #{tpu_custom_call.1} parent=1 // loop_footer_branch
      %13 = sbr.rel target = $region3
    $region8: #{tpu_custom_call.1} parent=1 // loop_exit
      _
    %254 = vsyncpa [#allocation3], 1
    %s255 = scalar_lea.sflag [#allocation3], 1
    %256 = vsyncpa %s255, 1
    %257 = vsyncpa [#allocation5], 1
    %s258 = scalar_lea.sflag [#allocation5], 1
    %259 = vsyncpa %s258, 1

</llo_original>
